<compile_context>
chip_gen: v7x
topology: tpu7x:2x2x1
jax: 0.10.0
libtpu: 0.0.40
codegen_flags: <defaults>
</compile_context>

<pallas_src>
import functools

import jax
import jax.numpy as jnp
from jax import lax
from jax.experimental import pallas as pl
from jax.experimental.pallas import tpu as pltpu


def _round_up(x, m):
    return (x + m - 1) // m * m


def _chip_config():
    """Per-generation tiling defaults keyed off physical VMEM capacity."""
    vmem_cap = 64 * 1024 * 1024                    # conservative fallback (v7x per-TC VMEM)
    try:
        vmem_cap = int(pltpu.get_tpu_info().vmem_capacity_bytes)
    except Exception:
        pass
    if vmem_cap >= 96 * 1024 * 1024:
        # v5e / v6e class (128 MiB physical VMEM): large row tiles -> compute-bound.
        return dict(tile_m=1024, tile_h=1024, vmem_limit_bytes=100 * 1024 * 1024)
    # v7x class (64 MiB per TC) or unknown: smaller tiles, leave headroom for the compiler's
    # internal f32 'h' intermediate, double buffers and semaphores.
    return dict(
        tile_m=512,
        tile_h=512,
        vmem_limit_bytes=max(32 * 1024 * 1024,
                             min(52 * 1024 * 1024, vmem_cap - 12 * 1024 * 1024)),
    )


def _ffn_kernel(x_ref, ln_g_ref, ln_b_ref, w1_ref, b1_ref, w2_ref, b2_ref,
                o_ref, xn_ref, *, eps, d_real):
    """Grid: (row tiles [parallel], hidden tiles [arbitrary])."""
    k = pl.program_id(1)

    # --- once per row tile: LayerNorm in f32, cache normalized activations as bf16 ---
    @pl.when(k == 0)
    def _():
        x = x_ref[...].astype(jnp.float32)            # (tile_m, d_pad)
        d_pad = x.shape[-1]
        inv_d = 1.0 / d_real
        # padded lanes of x are zero, so the sum over d_pad equals the sum over d_real
        mean = jnp.sum(x, axis=-1, keepdims=True) * inv_d
        centered = x - mean
        if d_pad != d_real:
            # mask padded lanes before the variance sum (they'd otherwise contribute mean^2)
            mask = lax.broadcasted_iota(jnp.int32, x.shape, 1) < d_real
            centered = jnp.where(mask, centered, 0.0)
        var = jnp.sum(centered * centered, axis=-1, keepdims=True) * inv_d
        xn = centered * lax.rsqrt(var + eps)
        xn = xn * ln_g_ref[...] + ln_b_ref[...]       # padded gamma/beta are 0 -> padded lanes 0
        xn_ref[...] = xn.astype(xn_ref.dtype)         # bf16 for the MXU
        # Output block is resident across k (its index_map ignores k); use it as the f32
        # accumulator, seeded with b2 -> no separate acc scratch, no final copy.
        o_ref[...] = jnp.broadcast_to(b2_ref[...], o_ref.shape)

    # --- Linear(dim -> hidden tile): bf16 MXU inputs, f32 accumulation ---
    h = jnp.dot(xn_ref[...], w1_ref[...], preferred_element_type=jnp.float32)
    h = h + b1_ref[...]

    # --- GELU (exact, erf-based: torch.nn.GELU default) ---
    # TODO(synk): on v5e, jax.nn.gelu(approximate=True) would move this work VPU -> EUP.
    h = 0.5 * h * (1.0 + lax.erf(h * 0.7071067811865476))

    # --- Dropout(p=0.0) is identity ---
    # TODO(synk): non-zero dropout would need pltpu.prng_* masking; omitted since p=0.0.

    # --- Linear(hidden tile -> dim), accumulate into the resident f32 output block ---
    o_ref[...] += jnp.dot(h.astype(w2_ref.dtype), w2_ref[...],
                          preferred_element_type=jnp.float32)


def make_feed_forward(ln_g, ln_b, w1, b1, w2, b2, *, eps=1e-5,
                      tile_m=None, tile_h=None, vmem_limit_bytes=None):
    """One-time parameter prep (pad + cast to bf16), hoisted out of the per-call path.

    w1: (D, H) in (in, out) layout; w2: (H, D).  Returns apply(x): (B, S, D) -> (B, S, D).
    """
    cfg = _chip_config()
    tile_m = cfg["tile_m"] if tile_m is None else tile_m
    tile_h = cfg["tile_h"] if tile_h is None else tile_h
    vmem_limit_bytes = cfg["vmem_limit_bytes"] if vmem_limit_bytes is None else vmem_limit_bytes

    D, H = w1.shape
    d_pad = _round_up(D, 128)
    tile_h = min(tile_h, _round_up(H, 128))
    h_pad = _round_up(H, tile_h)

    # Weights in bf16 (halves DMA / VMEM footprint, hits MXU bf16 peak); biases / LN in f32.
    # Padded rows/cols are zero, so they contribute nothing to the matmuls.
    ln_g_p = jnp.pad(ln_g.astype(jnp.float32).reshape(1, D), ((0, 0), (0, d_pad - D)))
    ln_b_p = jnp.pad(ln_b.astype(jnp.float32).reshape(1, D), ((0, 0), (0, d_pad - D)))
    w1_p = jnp.pad(w1.astype(jnp.bfloat16), ((0, d_pad - D), (0, h_pad - H)))
    b1_p = jnp.pad(b1.astype(jnp.float32).reshape(1, H), ((0, 0), (0, h_pad - H)))
    w2_p = jnp.pad(w2.astype(jnp.bfloat16), ((0, h_pad - H), (0, d_pad - D)))
    b2_p = jnp.pad(b2.astype(jnp.float32).reshape(1, D), ((0, 0), (0, d_pad - D)))
    params = (ln_g_p, ln_b_p, w1_p, b1_p, w2_p, b2_p)

    def _vmem_estimate(tm, th):
        return (2 * tm * d_pad * 2          # x (bf16) double buffer
                + 2 * tm * d_pad * 4        # output (f32 accumulator) double buffer
                + tm * d_pad * 2            # cached LayerNorm (bf16) scratch
                + 2 * 2 * d_pad * th * 2    # W1 + W2 (bf16) double buffers
                + tm * th * 4               # f32 'h' intermediate
                + (2 * th + 6 * d_pad) * 4)  # biases / LN params

    def apply(x):
        B, S, Dx = x.shape
        assert Dx == D, f"expected last dim {D}, got {Dx}"
        M = B * S
        m8 = _round_up(M, 8)

        tm = min(tile_m, m8)
        # Shrink the row tile until the pipeline fits the VMEM limit (covers very large D).
        # TODO(synk): for D >= ~8k on v7x an additional output-D tile axis would be better.
        while tm > 64 and _vmem_estimate(tm, tile_h) > vmem_limit_bytes:
            tm //= 2
        tm = max(8, tm - tm % 8)
        # Megacore (v7x): make sure the parallel row axis has >= 2 tiles when M allows it.
        if m8 > 8 and m8 <= tm:
            tm = _round_up((m8 + 1) // 2, 8)
        m_pad = _round_up(m8, tm)
        n_row_tiles = m_pad // tm

        # Stream activations in bf16 (halves x HBM traffic and its VMEM double buffers).
        x2d = x.reshape(M, D).astype(jnp.bfloat16)
        x2d = jnp.pad(x2d, ((0, m_pad - M), (0, d_pad - D)))

        grid = (n_row_tiles, h_pad // tile_h)
        kernel = functools.partial(_ffn_kernel, eps=eps, d_real=D)

        cost = pl.CostEstimate(
            flops=4 * m_pad * d_pad * h_pad,                       # two matmuls, 2 flops / MAC
            transcendentals=m_pad * h_pad,                         # erf in GELU
            bytes_accessed=int(m_pad * d_pad * 2                   # x (bf16)
                               + m_pad * d_pad * 4                 # out (f32)
                               + n_row_tiles * 2 * d_pad * h_pad * 2),  # W1+W2 per row tile
        )

        out2d = pl.pallas_call(
            kernel,
            out_shape=jax.ShapeDtypeStruct((m_pad, d_pad), jnp.float32),
            grid_spec=pltpu.PrefetchScalarGridSpec(
                num_scalar_prefetch=0,
                grid=grid,
                in_specs=[
                    pl.BlockSpec((tm, d_pad), lambda i, k: (i, 0)),      # x rows (once per i)
                    pl.BlockSpec((1, d_pad), lambda i, k: (0, 0)),       # LN gamma
                    pl.BlockSpec((1, d_pad), lambda i, k: (0, 0)),       # LN beta
                    pl.BlockSpec((d_pad, tile_h), lambda i, k: (0, k)),  # W1 hidden tile
                    pl.BlockSpec((1, tile_h), lambda i, k: (0, k)),      # b1 hidden tile
                    pl.BlockSpec((tile_h, d_pad), lambda i, k: (k, 0)),  # W2 hidden tile
                    pl.BlockSpec((1, d_pad), lambda i, k: (0, 0)),       # b2
                ],
                out_specs=pl.BlockSpec((tm, d_pad), lambda i, k: (i, 0)),
                scratch_shapes=[
                    pltpu.VMEM((tm, d_pad), jnp.bfloat16),  # cached LayerNorm output
                ],
            ),
            compiler_params=pltpu.CompilerParams(
                dimension_semantics=("parallel", "arbitrary"),
                vmem_limit_bytes=vmem_limit_bytes,
            ),
            cost_estimate=cost,
        )(x2d, *params)

        return out2d[:M, :D].reshape(B, S, D).astype(x.dtype)

    return apply


def _reference(x, ln_g, ln_b, w1, b1, w2, b2, eps=1e-5):
    B, S, D = x.shape
    mean = jnp.mean(x, axis=-1, keepdims=True)
    var = jnp.mean((x - mean) ** 2, axis=-1, keepdims=True)
    xn = (x - mean) / jnp.sqrt(var + eps) * ln_g + ln_b
    xn2 = xn.reshape(-1, D)
    h = jnp.dot(xn2, w1, precision=lax.Precision.HIGHEST) + b1
    h = 0.5 * h * (1.0 + lax.erf(h / jnp.sqrt(2.0)))
    out = jnp.dot(h, w2, precision=lax.Precision.HIGHEST) + b2
    return out.reshape(B, S, -1)


if __name__ == "__main__":
    # Small but lane-dense shapes (D, H multiples of 128).
    B, S, D, H = 2, 8, 128, 256

    key = jax.random.PRNGKey(0)
    kx, k1, k2, k3, k4 = jax.random.split(key, 5)

    x = jax.random.normal(kx, (B, S, D), dtype=jnp.float32)

    # Parameter init mirroring PyTorch defaults:
    #   LayerNorm: weight=1, bias=0
    #   Linear: uniform(-1/sqrt(fan_in), 1/sqrt(fan_in)) for weight and bias
    ln_g = jnp.ones((D,), jnp.float32)
    ln_b = jnp.zeros((D,), jnp.float32)
    bound1 = 1.0 / jnp.sqrt(jnp.float32(D))
    w1 = jax.random.uniform(k1, (D, H), jnp.float32, -bound1, bound1)   # (in, out) layout
    b1 = jax.random.uniform(k2, (H,), jnp.float32, -bound1, bound1)
    bound2 = 1.0 / jnp.sqrt(jnp.float32(H))
    w2 = jax.random.uniform(k3, (H, D), jnp.float32, -bound2, bound2)
    b2 = jax.random.uniform(k4, (D,), jnp.float32, -bound2, bound2)

    # Parameter prep (pad + bf16 cast) happens once here, outside the per-call hot path.
    # tile_h=128 -> two hidden tiles, exercising the resident-output accumulator / pl.when paths.
    ffn = make_feed_forward(ln_g, ln_b, w1, b1, w2, b2, tile_h=128)
    out = jax.jit(ffn)(x)
    out = jax.block_until_ready(out)

    ref = _reference(x, ln_g, ln_b, w1, b1, w2, b2)
    assert out.shape == (B, S, D)
    # bf16-streamed x / bf16 MXU inputs (f32 accumulation) vs f32 reference -> loosened tolerance.
    max_err = jnp.max(jnp.abs(out - ref))
    assert jnp.allclose(out, ref, atol=3e-2, rtol=3e-2), f"mismatch vs reference (max abs err {max_err})"

    print("KERNEL_OK")
</pallas_src>

<mosaic_0001>
module attributes {stable_mosaic.version = 11 : i64} {
  func.func @_ffn_kernel(%arg0: i32, %arg1: i32, %arg2: memref<8x128xbf16, #tpu.memory_space<vmem>>, %arg3: memref<1x128xf32, #tpu.memory_space<vmem>>, %arg4: memref<1x128xf32, #tpu.memory_space<vmem>>, %arg5: memref<128x128xbf16, #tpu.memory_space<vmem>>, %arg6: memref<1x128xf32, #tpu.memory_space<vmem>>, %arg7: memref<128x128xbf16, #tpu.memory_space<vmem>>, %arg8: memref<1x128xf32, #tpu.memory_space<vmem>>, %arg9: memref<8x128xf32, #tpu.memory_space<vmem>>, %arg10: memref<8x128xbf16, #tpu.memory_space<vmem>>) attributes {dimension_semantics = [#tpu.dimension_semantics<parallel>, #tpu.dimension_semantics<arbitrary>], iteration_bounds = array<i64: 2, 2>, scalar_prefetch = 0 : i64, scratch_operands = 1 : i64, tpu.core_type = #tpu.core_type<tc>, window_params = [{transform_indices = @transform_0, window_bounds = array<i64: 8, 128>}, {pipeline_mode = #tpu.pipeline_mode<synchronous>, transform_indices = @transform_1, window_bounds = array<i64: 1, 128>}, {pipeline_mode = #tpu.pipeline_mode<synchronous>, transform_indices = @transform_2, window_bounds = array<i64: 1, 128>}, {transform_indices = @transform_3, window_bounds = array<i64: 128, 128>}, {transform_indices = @transform_4, window_bounds = array<i64: 1, 128>}, {transform_indices = @transform_5, window_bounds = array<i64: 128, 128>}, {pipeline_mode = #tpu.pipeline_mode<synchronous>, transform_indices = @transform_6, window_bounds = array<i64: 1, 128>}, {transform_indices = @transform_7, window_bounds = array<i64: 8, 128>}]} {
    %c0_i32 = arith.constant 0 : i32
    %0 = arith.cmpi eq, %arg1, %c0_i32 : i32
    %1 = arith.extui %0 : i1 to i32
    %c0_i32_0 = arith.constant 0 : i32
    %2 = arith.cmpi ne, %1, %c0_i32_0 : i32
    scf.if %2 {
      %c0_16 = arith.constant 0 : index
      %c0_17 = arith.constant 0 : index
      %23 = vector.load %arg2[%c0_16, %c0_17] : memref<8x128xbf16, #tpu.memory_space<vmem>>, vector<8x128xbf16>
      %24 = arith.extf %23 : vector<8x128xbf16> to vector<8x128xf32>
      %cst_18 = arith.constant dense<0.000000e+00> : vector<8xf32>
      %25 = vector.multi_reduction <add>, %24, %cst_18 [1] : vector<8x128xf32> to vector<8xf32>
      %26 = vector.shape_cast %25 : vector<8xf32> to vector<8x1xf32>
      %cst_19 = arith.constant 7.812500e-03 : f32
      %27 = vector.broadcast %cst_19 : f32 to vector<8x1xf32>
      %28 = arith.mulf %26, %27 : vector<8x1xf32>
      %29 = vector.broadcast %28 : vector<8x1xf32> to vector<8x128xf32>
      %30 = arith.subf %24, %29 : vector<8x128xf32>
      %31 = arith.mulf %30, %30 : vector<8x128xf32>
      %cst_20 = arith.constant dense<0.000000e+00> : vector<8xf32>
      %32 = vector.multi_reduction <add>, %31, %cst_20 [1] : vector<8x128xf32> to vector<8xf32>
      %33 = vector.shape_cast %32 : vector<8xf32> to vector<8x1xf32>
      %cst_21 = arith.constant 7.812500e-03 : f32
      %34 = vector.broadcast %cst_21 : f32 to vector<8x1xf32>
      %35 = arith.mulf %33, %34 : vector<8x1xf32>
      %cst_22 = arith.constant 9.99999974E-6 : f32
      %36 = vector.broadcast %cst_22 : f32 to vector<8x1xf32>
      %37 = arith.addf %35, %36 : vector<8x1xf32>
      %38 = math.rsqrt %37 : vector<8x1xf32>
      %39 = vector.broadcast %38 : vector<8x1xf32> to vector<8x128xf32>
      %40 = arith.mulf %30, %39 : vector<8x128xf32>
      %c0_23 = arith.constant 0 : index
      %c0_24 = arith.constant 0 : index
      %41 = vector.load %arg3[%c0_23, %c0_24] : memref<1x128xf32, #tpu.memory_space<vmem>>, vector<1x128xf32>
      %42 = vector.broadcast %41 : vector<1x128xf32> to vector<8x128xf32>
      %43 = arith.mulf %40, %42 : vector<8x128xf32>
      %c0_25 = arith.constant 0 : index
      %c0_26 = arith.constant 0 : index
      %44 = vector.load %arg4[%c0_25, %c0_26] : memref<1x128xf32, #tpu.memory_space<vmem>>, vector<1x128xf32>
      %45 = vector.broadcast %44 : vector<1x128xf32> to vector<8x128xf32>
      %46 = arith.addf %43, %45 : vector<8x128xf32>
      %47 = arith.truncf %46 : vector<8x128xf32> to vector<8x128xbf16>
      %c0_27 = arith.constant 0 : index
      %c0_28 = arith.constant 0 : index
      %48 = vector.load %arg10[%c0_27, %c0_28] : memref<8x128xbf16, #tpu.memory_space<vmem>>, vector<8x128xbf16>
      tpu.vector_store %arg10[%c0_27, %c0_28], %47 {strides = array<i32>} : memref<8x128xbf16, #tpu.memory_space<vmem>>, vector<8x128xbf16>,
      %c0_29 = arith.constant 0 : index
      %c0_30 = arith.constant 0 : index
      %49 = vector.load %arg8[%c0_29, %c0_30] : memref<1x128xf32, #tpu.memory_space<vmem>>, vector<1x128xf32>
      %50 = vector.shape_cast %49 : vector<1x128xf32> to vector<1x128xf32>
      %51 = vector.broadcast %50 : vector<1x128xf32> to vector<8x128xf32>
      %c0_31 = arith.constant 0 : index
      %c0_32 = arith.constant 0 : index
      %52 = vector.load %arg9[%c0_31, %c0_32] : memref<8x128xf32, #tpu.memory_space<vmem>>, vector<8x128xf32>
      tpu.vector_store %arg9[%c0_31, %c0_32], %51 {strides = array<i32>} : memref<8x128xf32, #tpu.memory_space<vmem>>, vector<8x128xf32>,
    } else {
    }
    %c0 = arith.constant 0 : index
    %c0_1 = arith.constant 0 : index
    %3 = vector.load %arg10[%c0, %c0_1] : memref<8x128xbf16, #tpu.memory_space<vmem>>, vector<8x128xbf16>
    %c0_2 = arith.constant 0 : index
    %c0_3 = arith.constant 0 : index
    %4 = vector.load %arg5[%c0_2, %c0_3] : memref<128x128xbf16, #tpu.memory_space<vmem>>, vector<128x128xbf16>
    %cst = arith.constant dense<0.000000e+00> : vector<8x128xf32>
    %5 = tpu.matmul %3, %4, %cst {dimension_numbers = #tpu.dot_dimension_numbers<[1], [0], [0], [1], [0, 0, 1, 1], [], []>} : vector<8x128xbf16>, vector<128x128xbf16>, vector<8x128xf32> -> vector<8x128xf32>
    %c0_4 = arith.constant 0 : index
    %c0_5 = arith.constant 0 : index
    %6 = vector.load %arg6[%c0_4, %c0_5] : memref<1x128xf32, #tpu.memory_space<vmem>>, vector<1x128xf32>
    %7 = vector.broadcast %6 : vector<1x128xf32> to vector<8x128xf32>
    %8 = arith.addf %5, %7 : vector<8x128xf32>
    %cst_6 = arith.constant 5.000000e-01 : f32
    %9 = vector.broadcast %cst_6 : f32 to vector<8x128xf32>
    %10 = arith.mulf %9, %8 : vector<8x128xf32>
    %cst_7 = arith.constant 0.707106769 : f32
    %11 = vector.broadcast %cst_7 : f32 to vector<8x128xf32>
    %12 = arith.mulf %8, %11 : vector<8x128xf32>
    %13 = math.erf %12 : vector<8x128xf32>
    %cst_8 = arith.constant 1.000000e+00 : f32
    %14 = vector.broadcast %cst_8 : f32 to vector<8x128xf32>
    %15 = arith.addf %14, %13 : vector<8x128xf32>
    %16 = arith.mulf %10, %15 : vector<8x128xf32>
    %c0_9 = arith.constant 0 : index
    %c0_10 = arith.constant 0 : index
    %17 = vector.load %arg9[%c0_9, %c0_10] : memref<8x128xf32, #tpu.memory_space<vmem>>, vector<8x128xf32>
    %18 = arith.truncf %16 : vector<8x128xf32> to vector<8x128xbf16>
    %c0_11 = arith.constant 0 : index
    %c0_12 = arith.constant 0 : index
    %19 = vector.load %arg7[%c0_11, %c0_12] : memref<128x128xbf16, #tpu.memory_space<vmem>>, vector<128x128xbf16>
    %cst_13 = arith.constant dense<0.000000e+00> : vector<8x128xf32>
    %20 = tpu.matmul %18, %19, %cst_13 {dimension_numbers = #tpu.dot_dimension_numbers<[1], [0], [0], [1], [0, 0, 1, 1], [], []>} : vector<8x128xbf16>, vector<128x128xbf16>, vector<8x128xf32> -> vector<8x128xf32>
    %21 = arith.addf %17, %20 : vector<8x128xf32>
    %c0_14 = arith.constant 0 : index
    %c0_15 = arith.constant 0 : index
    %22 = vector.load %arg9[%c0_14, %c0_15] : memref<8x128xf32, #tpu.memory_space<vmem>>, vector<8x128xf32>
    tpu.vector_store %arg9[%c0_14, %c0_15], %21 {strides = array<i32>} : memref<8x128xf32, #tpu.memory_space<vmem>>, vector<8x128xf32>,
    return
  }
  func.func @transform_0(%arg0: i32, %arg1: i32) -> (i32, i32) {
    %c0_i32 = arith.constant 0 : i32
    %c0_i32_0 = arith.constant 0 : i32
    return %arg0, %c0_i32 : i32, i32
  }
  func.func @transform_1(%arg0: i32, %arg1: i32) -> (i32, i32) {
    %c0_i32 = arith.constant 0 : i32
    %c0_i32_0 = arith.constant 0 : i32
    %c0_i32_1 = arith.constant 0 : i32
    return %c0_i32, %c0_i32_0 : i32, i32
  }
  func.func @transform_2(%arg0: i32, %arg1: i32) -> (i32, i32) {
    %c0_i32 = arith.constant 0 : i32
    %c0_i32_0 = arith.constant 0 : i32
    %c0_i32_1 = arith.constant 0 : i32
    return %c0_i32, %c0_i32_0 : i32, i32
  }
  func.func @transform_3(%arg0: i32, %arg1: i32) -> (i32, i32) {
    %c0_i32 = arith.constant 0 : i32
    %c0_i32_0 = arith.constant 0 : i32
    return %c0_i32, %arg1 : i32, i32
  }
  func.func @transform_4(%arg0: i32, %arg1: i32) -> (i32, i32) {
    %c0_i32 = arith.constant 0 : i32
    %c0_i32_0 = arith.constant 0 : i32
    return %c0_i32, %arg1 : i32, i32
  }
  func.func @transform_5(%arg0: i32, %arg1: i32) -> (i32, i32) {
    %c0_i32 = arith.constant 0 : i32
    %c0_i32_0 = arith.constant 0 : i32
    return %arg1, %c0_i32 : i32, i32
  }
  func.func @transform_6(%arg0: i32, %arg1: i32) -> (i32, i32) {
    %c0_i32 = arith.constant 0 : i32
    %c0_i32_0 = arith.constant 0 : i32
    %c0_i32_1 = arith.constant 0 : i32
    return %c0_i32, %c0_i32_0 : i32, i32
  }
  func.func @transform_7(%arg0: i32, %arg1: i32) -> (i32, i32) {
    %c0_i32 = arith.constant 0 : i32
    %c0_i32_0 = arith.constant 0 : i32
    return %arg0, %c0_i32 : i32, i32
  }
}

</mosaic_0001>

<llo_original>
// kernel: apply.1
$region0: #{apply.1}
  #allocation0 [shape = 'u32[]', space=smem, size = 0x4, offset = 0x4, fixed_abs, tag = 'smem constant byte address 0x4 - core index']
  #allocation1 [shape = 'u32[144,128]{1,0:T(1,128)}', space=vmem, size = 0x12000, scoped, tag = 'internal scratch']
  #allocation2 [shape = 'bf16[8,128]{1,0:T(8,128)(2,1)}', space=vmem, size = 0x800, scoped, tag = 'scratch operand']
  %s0 = inlined_call_operand.vmem [shape: bf16[16,128], index: 0, kind: input, shape index: {}]
  %s1 = inlined_call_operand.vmem [shape: f32[1,128], index: 1, kind: input, shape index: {}]
  %s2 = inlined_call_operand.vmem [shape: f32[1,128], index: 2, kind: input, shape index: {}]
  %s3 = inlined_call_operand.vmem [shape: bf16[128,256], index: 3, kind: input, shape index: {}]
  %s4 = inlined_call_operand.vmem [shape: f32[1,256], index: 4, kind: input, shape index: {}]
  %s5 = inlined_call_operand.vmem [shape: bf16[256,128], index: 5, kind: input, shape index: {}]
  %s6 = inlined_call_operand.vmem [shape: f32[1,128], index: 6, kind: input, shape index: {}]
  %s7 = inlined_call_operand.hbm [shape: f32[16,128], index: 7, kind: output, shape index: {}]
  %s8 = sld [smem:[#allocation0]]
  $region106: #{apply.1} parent=0
    _
  %s10 = ssub.s32 1, %s8
  %s11 = scalar_select 0, %s10, %s8
  $region1: #{apply.1} parent=0
    #allocation3 [shape = 'u8[65536]{0}', space=vmem, size = 0x10000, scoped, tag = 'input window, operand 3']
    #allocation4 [shape = 'u8[8192]{0}', space=vmem, size = 0x2000, scoped, tag = 'output window, operand 0']
    #allocation5 [shape = 's32[2]{0}', space=sflag, size = 0x8, scoped, tag = 'scoped memory for apply.1']
    %12 = vsyncpa [#allocation5], 0
    %s13 = scalar_lea.sflag [#allocation5], 1
    %14 = vsyncpa %s13, 0
    loop: start=0, step=1, limit=6
    $region2: #{apply.1} parent=1 // loop_pre_header
      _
    $region3: #{apply.1} parent=1 // loop_header
      %s16 = sphi 0, %s20
      %p17 = scmp.ge.s32.totalorder %s16, 6
      %s23 = sphi 0, %s35
      %s24 = sphi 0, %s31
      %s25 = sphi 0, %s23
      %s26 = sphi 0, %s24
      %s27 = sphi 0, %s25
      %s28 = sphi 0, %s26
      %s38 = sphi 0, %s40
      %s41 = sphi 0, %s38
      %s42 = sphi 0, %s41
      %s58 = sphi 0, %s42
      %s62 = sphi 0, %s62
      %s64 = sphi 0, %s62
      %s65 = sphi 0, %s64
      %s79 = sphi 0, %s65
      %s83 = sphi 0, %s83
      %s85 = sphi 0, %s83
      %s86 = sphi 0, %s85
      %s100 = sphi 0, %s86
      %s106 = sphi 0, %s108
      %s109 = sphi 0, %s106
      %s110 = sphi 0, %s109
      %s126 = sphi 0, %s110
      %s132 = sphi 0, %s134
      %s135 = sphi 0, %s132
      %s136 = sphi 0, %s135
      %s152 = sphi 0, %s136
      %s158 = sphi 0, %s160
      %s161 = sphi 0, %s158
      %s162 = sphi 0, %s161
      %s178 = sphi 0, %s162
      %s182 = sphi 0, %s182
      %s184 = sphi 0, %s182
      %s185 = sphi 0, %s184
      %s199 = sphi 0, %s185
      %s205 = sphi 0, %s207
      %s208 = sphi 0, %s205
      %s209 = sphi 0, %s208
      %s225 = sphi 0, %s209
    $region4: #{apply.1} parent=1 // loop_header_branch
      %19 = sbr.rel (%p17) target = $region8
    $region5: #{apply.1} parent=1 // loop_body
      %s21 = ssub.s32 %s16, 1
      %s22 = ssub.s32 %s16, 2
      %s29 = sadd.s32 1, %s24
      %p30 = scmp.ge.s32.totalorder %s29, 2
      %s31 = scalar_select %p30, 0, %s29
      %s32 = sadd.s32 1, %s23
      %s33 = scalar_select %p30, %s32, %s23
      %p34 = scmp.ge.s32.totalorder %s33, 2
      %s35 = scalar_select %p34, 0, %s33
      %s36 = ssub.s32 %s23, %s35
      %p37 = scmp.eq.s32.totalorder %s36, 0
      %s39 = sadd.s32 %s38, 1
      %s40 = scalar_select %p37, %s38, %s39
      %p43 = pneg %p37
      %p44 = scmp.eq.s32.totalorder %s16, 3
      %p45 = por %p43, %p44
      %p46 = scmp.ne.s32.totalorder %s38, %s41
      %p47 = scmp.eq.s32.totalorder %s16, 0
      %p48 = por %p46, %p47
      %p49 = scmp.ne.s32.totalorder %s38, %s41
      %p50 = scmp.eq.s32.totalorder %s21, 3
      %p51 = por %p49, %p50
      %p52 = scmp.ne.s32.totalorder %s41, %s42
      %p53 = scmp.eq.s32.totalorder %s21, 0
      %p54 = por %p52, %p53
      %p55 = scmp.ne.s32.totalorder %s41, %s42
      %p56 = scmp.eq.s32.totalorder %s22, 3
      %p57 = por %p55, %p56
      %p59 = scmp.ne.s32.totalorder %s42, %s58
      %p60 = scmp.eq.s32.totalorder %s22, 0
      %p61 = por %p59, %p60
      %s63 = sadd.s32 %s62, 1
      %p66 = scmp.eq.s32.totalorder %s16, 3
      %p67 = scmp.ne.s32.totalorder %s62, %s64
      %p68 = scmp.eq.s32.totalorder %s16, 0
      %p69 = por %p67, %p68
      %p70 = scmp.ne.s32.totalorder %s62, %s64
      %p71 = scmp.eq.s32.totalorder %s21, 3
      %p72 = por %p70, %p71
      %p73 = scmp.ne.s32.totalorder %s64, %s65
      %p74 = scmp.eq.s32.totalorder %s21, 0
      %p75 = por %p73, %p74
      %p76 = scmp.ne.s32.totalorder %s64, %s65
      %p77 = scmp.eq.s32.totalorder %s22, 3
      %p78 = por %p76, %p77
      %p80 = scmp.ne.s32.totalorder %s65, %s79
      %p81 = scmp.eq.s32.totalorder %s22, 0
      %p82 = por %p80, %p81
      %s84 = sadd.s32 %s83, 1
      %p87 = scmp.eq.s32.totalorder %s16, 3
      %p88 = scmp.ne.s32.totalorder %s83, %s85
      %p89 = scmp.eq.s32.totalorder %s16, 0
      %p90 = por %p88, %p89
      %p91 = scmp.ne.s32.totalorder %s83, %s85
      %p92 = scmp.eq.s32.totalorder %s21, 3
      %p93 = por %p91, %p92
      %p94 = scmp.ne.s32.totalorder %s85, %s86
      %p95 = scmp.eq.s32.totalorder %s21, 0
      %p96 = por %p94, %p95
      %p97 = scmp.ne.s32.totalorder %s85, %s86
      %p98 = scmp.eq.s32.totalorder %s22, 3
      %p99 = por %p97, %p98
      %p101 = scmp.ne.s32.totalorder %s86, %s100
      %p102 = scmp.eq.s32.totalorder %s22, 0
      %p103 = por %p101, %p102
      %s104 = ssub.s32 %s24, %s31
      %p105 = scmp.eq.s32.totalorder %s104, 0
      %s107 = sadd.s32 %s106, 1
      %s108 = scalar_select %p105, %s106, %s107
      %p111 = pneg %p105
      %p112 = scmp.eq.s32.totalorder %s16, 3
      %p113 = por %p111, %p112
      %p114 = scmp.ne.s32.totalorder %s106, %s109
      %p115 = scmp.eq.s32.totalorder %s16, 0
      %p116 = por %p114, %p115
      %p117 = scmp.ne.s32.totalorder %s106, %s109
      %p118 = scmp.eq.s32.totalorder %s21, 3
      %p119 = por %p117, %p118
      %p120 = scmp.ne.s32.totalorder %s109, %s110
      %p121 = scmp.eq.s32.totalorder %s21, 0
      %p122 = por %p120, %p121
      %p123 = scmp.ne.s32.totalorder %s109, %s110
      %p124 = scmp.eq.s32.totalorder %s22, 3
      %p125 = por %p123, %p124
      %p127 = scmp.ne.s32.totalorder %s110, %s126
      %p128 = scmp.eq.s32.totalorder %s22, 0
      %p129 = por %p127, %p128
      %s130 = ssub.s32 %s24, %s31
      %p131 = scmp.eq.s32.totalorder %s130, 0
      %s133 = sadd.s32 %s132, 1
      %s134 = scalar_select %p131, %s132, %s133
      %p137 = pneg %p131
      %p138 = scmp.eq.s32.totalorder %s16, 3
      %p139 = por %p137, %p138
      %p140 = scmp.ne.s32.totalorder %s132, %s135
      %p141 = scmp.eq.s32.totalorder %s16, 0
      %p142 = por %p140, %p141
      %p143 = scmp.ne.s32.totalorder %s132, %s135
      %p144 = scmp.eq.s32.totalorder %s21, 3
      %p145 = por %p143, %p144
      %p146 = scmp.ne.s32.totalorder %s135, %s136
      %p147 = scmp.eq.s32.totalorder %s21, 0
      %p148 = por %p146, %p147
      %p149 = scmp.ne.s32.totalorder %s135, %s136
      %p150 = scmp.eq.s32.totalorder %s22, 3
      %p151 = por %p149, %p150
      %p153 = scmp.ne.s32.totalorder %s136, %s152
      %p154 = scmp.eq.s32.totalorder %s22, 0
      %p155 = por %p153, %p154
      %s156 = ssub.s32 %s24, %s31
      %p157 = scmp.eq.s32.totalorder %s156, 0
      %s159 = sadd.s32 %s158, 1
      %s160 = scalar_select %p157, %s158, %s159
      %p163 = pneg %p157
      %p164 = scmp.eq.s32.totalorder %s16, 3
      %p165 = por %p163, %p164
      %p166 = scmp.ne.s32.totalorder %s158, %s161
      %p167 = scmp.eq.s32.totalorder %s16, 0
      %p168 = por %p166, %p167
      %p169 = scmp.ne.s32.totalorder %s158, %s161
      %p170 = scmp.eq.s32.totalorder %s21, 3
      %p171 = por %p169, %p170
      %p172 = scmp.ne.s32.totalorder %s161, %s162
      %p173 = scmp.eq.s32.totalorder %s21, 0
      %p174 = por %p172, %p173
      %p175 = scmp.ne.s32.totalorder %s161, %s162
      %p176 = scmp.eq.s32.totalorder %s22, 3
      %p177 = por %p175, %p176
      %p179 = scmp.ne.s32.totalorder %s162, %s178
      %p180 = scmp.eq.s32.totalorder %s22, 0
      %p181 = por %p179, %p180
      %s183 = sadd.s32 %s182, 1
      %p186 = scmp.eq.s32.totalorder %s16, 3
      %p187 = scmp.ne.s32.totalorder %s182, %s184
      %p188 = scmp.eq.s32.totalorder %s16, 0
      %p189 = por %p187, %p188
      %p190 = scmp.ne.s32.totalorder %s182, %s184
      %p191 = scmp.eq.s32.totalorder %s21, 3
      %p192 = por %p190, %p191
      %p193 = scmp.ne.s32.totalorder %s184, %s185
      %p194 = scmp.eq.s32.totalorder %s21, 0
      %p195 = por %p193, %p194
      %p196 = scmp.ne.s32.totalorder %s184, %s185
      %p197 = scmp.eq.s32.totalorder %s22, 3
      %p198 = por %p196, %p197
      %p200 = scmp.ne.s32.totalorder %s185, %s199
      %p201 = scmp.eq.s32.totalorder %s22, 0
      %p202 = por %p200, %p201
      %s203 = ssub.s32 %s23, %s35
      %p204 = scmp.eq.s32.totalorder %s203, 0
      %s206 = sadd.s32 %s205, 1
      %s207 = scalar_select %p204, %s205, %s206
      %p210 = pneg %p204
      %p211 = scmp.eq.s32.totalorder %s16, 3
      %p212 = por %p210, %p211
      %p213 = scmp.ne.s32.totalorder %s205, %s208
      %p214 = scmp.eq.s32.totalorder %s16, 0
      %p215 = por %p213, %p214
      %p216 = scmp.ne.s32.totalorder %s205, %s208
      %p217 = scmp.eq.s32.totalorder %s21, 3
      %p218 = por %p216, %p217
      %p219 = scmp.ne.s32.totalorder %s208, %s209
      %p220 = scmp.eq.s32.totalorder %s21, 0
      %p221 = por %p219, %p220
      %p222 = scmp.ne.s32.totalorder %s208, %s209
      %p223 = scmp.eq.s32.totalorder %s22, 3
      %p224 = por %p222, %p223
      %p226 = scmp.ne.s32.totalorder %s209, %s225
      %p227 = scmp.eq.s32.totalorder %s22, 0
      %p228 = por %p226, %p227
      %p229 = scmp.le.s32.totalorder 1, %s16
      %p230 = scmp.lt.s32.totalorder %s16, 5
      %p231 = pnand %p229, %p230
      %p232 = pneg %p231
      // Predicated region
      $region9: #{apply.1} parent=5 // pred_check
        _
      $region10: #{apply.1} parent=5 // pred_check_branch
        %234 = sbr.rel (%p231) target = $region12
      $region11: #{apply.1} parent=5 // pred_region
        %s235 = ssub.s32 %s16, 1
        // Predicated region
        $region13: #{apply.1} parent=11 // pred_check
          %p236 = pneg %p75
        $region14: #{apply.1} parent=11 // pred_check_branch
          %238 = sbr.rel (%p236) target = $region16
        $region15: #{apply.1} parent=11 // pred_region
          _
        $region16: #{apply.1} parent=11 // pred_fallthru
          _
        // Predicated region
        $region17: #{apply.1} parent=11 // pred_check
          %p239 = pneg %p96
        $region18: #{apply.1} parent=11 // pred_check_branch
          %241 = sbr.rel (%p239) target = $region20
        $region19: #{apply.1} parent=11 // pred_region
          _
        $region20: #{apply.1} parent=11 // pred_fallthru
          _
        // Predicated region
        $region21: #{apply.1} parent=11 // pred_check
          %p242 = pneg %p195
        $region22: #{apply.1} parent=11 // pred_check_branch
          %244 = sbr.rel (%p242) target = $region24
        $region23: #{apply.1} parent=11 // pred_region
          _
        $region24: #{apply.1} parent=11 // pred_fallthru
          _
      $region12: #{apply.1} parent=5 // pred_fallthru
        _
      %p245 = scmp.lt.s32.totalorder %s16, 4
      // Predicated region
      $region25: #{apply.1} parent=5 // pred_check
        %p246 = pneg %p245
      $region26: #{apply.1} parent=5 // pred_check_branch
        %248 = sbr.rel (%p246) target = $region28
      $region27: #{apply.1} parent=5 // pred_region
        // Predicated region
        $region29: #{apply.1} parent=27 // pred_check
          %p249 = pneg %p48
        $region30: #{apply.1} parent=27 // pred_check_branch
          %251 = sbr.rel (%p249) target = $region32
        $region31: #{apply.1} parent=27 // pred_region
          %p252 = scmp.lt.s32.totalorder %s23, 1
          %s253 = scalar_select %p252, %s23, 1
          %s254 = smul.addr %s253, 4
          %s255 = scalar_lea.vmem %s0, %s254
        $region32: #{apply.1} parent=27 // pred_fallthru
          _
        // Predicated region
        $region33: #{apply.1} parent=27 // pred_check
          %p256 = pneg %p116
        $region34: #{apply.1} parent=27 // pred_check_branch
          %258 = sbr.rel (%p256) target = $region36
        $region35: #{apply.1} parent=27 // pred_region
          %s259 = sand.u32 %s106, 1
          %s260 = sand.u32 %s106, 1
          %s261 = smul.addr %s260, 64
          %s262 = scalar_lea.vmem [#allocation3], %s261
          %s263 = smul.addr %s24, 4
          %s264 = scalar_lea.vmem %s3, %s263
          // Predicated region
          $region37: #{apply.1} parent=35 // pred_check
            _
          $region38: #{apply.1} parent=35 // pred_check_branch
            %266 = sbr.rel (0) target = $region40
          $region39: #{apply.1} parent=35 // pred_region
            // Predicated region
            $region41: #{apply.1} parent=39 // pred_check
              _
            $region42: #{apply.1} parent=39 // pred_check_branch
              %268 = sbr.rel target = $region44
            $region43: #{apply.1} parent=39 // pred_region
              // Predicated region
              $region56: #{apply.1} parent=43 // pred_check
                _
              $region57: #{apply.1} parent=43 // pred_check_branch
                %313 = sbr.rel (0) target = $region59
              $region58: #{apply.1} parent=43 // pred_region
                loop: start=0, step=1, limit=1
                $region60: #{apply.1} parent=58 // loop_pre_header
                  _
                $region61: #{apply.1} parent=58 // loop_header
                  %s315 = sphi 0, %s319
                  %p316 = scmp.ge.s32.totalorder %s315, 1
                  %s320 = sphi %s264, %s264
                  %s321 = sphi %s262, %s262
                $region62: #{apply.1} parent=58 // loop_header_branch
                  %318 = sbr.rel (%p316) target = $region66
                $region63: #{apply.1} parent=58 // loop_body
                  _
                $region64: #{apply.1} parent=58 // loop_footer
                  %s319 = sadd.s32 1, %s315
                $region65: #{apply.1} parent=58 // loop_footer_branch
                  %314 = sbr.rel target = $region61
                $region66: #{apply.1} parent=58 // loop_exit
                  _
                loop: start=0, step=1, limit=1
                $region67: #{apply.1} parent=58 // loop_pre_header
                  _
                $region68: #{apply.1} parent=58 // loop_header
                  %s324 = sphi 0, %s328
                  %p325 = scmp.ge.s32.totalorder %s324, 1
                  %s329 = sphi %s264, %s264
                  %s330 = sphi %s262, %s262
                $region69: #{apply.1} parent=58 // loop_header_branch
                  %327 = sbr.rel (%p325) target = $region73
                $region70: #{apply.1} parent=58 // loop_body
                  %v331 = vld [vmem:[%s329] sm:$0xf]
                  %332 = vst [vmem:[%s330] sm:$0xf] %v331
                  %v333 = vld [vmem:[%s329 + $0x8] sm:$0xf]
                  %334 = vst [vmem:[%s330 + $0x4] sm:$0xf] %v333
                  %v335 = vld [vmem:[%s329 + $0x10] sm:$0xf]
                  %336 = vst [vmem:[%s330 + $0x8] sm:$0xf] %v335
                  %v337 = vld [vmem:[%s329 + $0x18] sm:$0xf]
                  %338 = vst [vmem:[%s330 + $0xc] sm:$0xf] %v337
                  %v339 = vld [vmem:[%s329 + $0x20] sm:$0xf]
                  %340 = vst [vmem:[%s330 + $0x10] sm:$0xf] %v339
                  %v341 = vld [vmem:[%s329 + $0x28] sm:$0xf]
                  %342 = vst [vmem:[%s330 + $0x14] sm:$0xf] %v341
                  %v343 = vld [vmem:[%s329 + $0x30] sm:$0xf]
                  %344 = vst [vmem:[%s330 + $0x18] sm:$0xf] %v343
                  %v345 = vld [vmem:[%s329 + $0x38] sm:$0xf]
                  %346 = vst [vmem:[%s330 + $0x1c] sm:$0xf] %v345
                  %v347 = vld [vmem:[%s329 + $0x40] sm:$0xf]
                  %348 = vst [vmem:[%s330 + $0x20] sm:$0xf] %v347
                  %v349 = vld [vmem:[%s329 + $0x48] sm:$0xf]
                  %350 = vst [vmem:[%s330 + $0x24] sm:$0xf] %v349
                  %v351 = vld [vmem:[%s329 + $0x50] sm:$0xf]
                  %352 = vst [vmem:[%s330 + $0x28] sm:$0xf] %v351
                  %v353 = vld [vmem:[%s329 + $0x58] sm:$0xf]
                  %354 = vst [vmem:[%s330 + $0x2c] sm:$0xf] %v353
                  %v355 = vld [vmem:[%s329 + $0x60] sm:$0xf]
                  %356 = vst [vmem:[%s330 + $0x30] sm:$0xf] %v355
                  %v357 = vld [vmem:[%s329 + $0x68] sm:$0xf]
                  %358 = vst [vmem:[%s330 + $0x34] sm:$0xf] %v357
                  %v359 = vld [vmem:[%s329 + $0x70] sm:$0xf]
                  %360 = vst [vmem:[%s330 + $0x38] sm:$0xf] %v359
                  %v361 = vld [vmem:[%s329 + $0x78] sm:$0xf]
                  %362 = vst [vmem:[%s330 + $0x3c] sm:$0xf] %v361
                $region71: #{apply.1} parent=58 // loop_footer
                  %s328 = sadd.s32 1, %s324
                $region72: #{apply.1} parent=58 // loop_footer_branch
                  %323 = sbr.rel target = $region68
                $region73: #{apply.1} parent=58 // loop_exit
                  _
              $region59: #{apply.1} parent=43 // pred_fallthru
                _
            $region44: #{apply.1} parent=39 // pred_fallthru
              _
            // Predicated region
            $region45: #{apply.1} parent=39 // pred_check
              _
            $region46: #{apply.1} parent=39 // pred_check_branch
              %270 = sbr.rel (0) target = $region48
            $region47: #{apply.1} parent=39 // pred_region
              loop: start=0, step=1, limit=1
              $region49: #{apply.1} parent=47 // loop_pre_header
                _
              $region50: #{apply.1} parent=47 // loop_header
                %s273 = sphi 0, %s277
                %p274 = scmp.ge.s32.totalorder %s273, 1
                %s278 = sphi %s264, %s264
                %s279 = sphi %s262, %s262
              $region51: #{apply.1} parent=47 // loop_header_branch
                %276 = sbr.rel (%p274) target = $region55
              $region52: #{apply.1} parent=47 // loop_body
                %v280 = vld [vmem:[%s278] sm:$0xf]
                %281 = vst [vmem:[%s279] sm:$0xf] %v280
                %v282 = vld [vmem:[%s278 + $0x8] sm:$0xf]
                %283 = vst [vmem:[%s279 + $0x4] sm:$0xf] %v282
                %v284 = vld [vmem:[%s278 + $0x10] sm:$0xf]
                %285 = vst [vmem:[%s279 + $0x8] sm:$0xf] %v284
                %v286 = vld [vmem:[%s278 + $0x18] sm:$0xf]
                %287 = vst [vmem:[%s279 + $0xc] sm:$0xf] %v286
                %v288 = vld [vmem:[%s278 + $0x20] sm:$0xf]
                %289 = vst [vmem:[%s279 + $0x10] sm:$0xf] %v288
                %v290 = vld [vmem:[%s278 + $0x28] sm:$0xf]
                %291 = vst [vmem:[%s279 + $0x14] sm:$0xf] %v290
                %v292 = vld [vmem:[%s278 + $0x30] sm:$0xf]
                %293 = vst [vmem:[%s279 + $0x18] sm:$0xf] %v292
                %v294 = vld [vmem:[%s278 + $0x38] sm:$0xf]
                %295 = vst [vmem:[%s279 + $0x1c] sm:$0xf] %v294
                %v296 = vld [vmem:[%s278 + $0x40] sm:$0xf]
                %297 = vst [vmem:[%s279 + $0x20] sm:$0xf] %v296
                %v298 = vld [vmem:[%s278 + $0x48] sm:$0xf]
                %299 = vst [vmem:[%s279 + $0x24] sm:$0xf] %v298
                %v300 = vld [vmem:[%s278 + $0x50] sm:$0xf]
                %301 = vst [vmem:[%s279 + $0x28] sm:$0xf] %v300
                %v302 = vld [vmem:[%s278 + $0x58] sm:$0xf]
                %303 = vst [vmem:[%s279 + $0x2c] sm:$0xf] %v302
                %v304 = vld [vmem:[%s278 + $0x60] sm:$0xf]
                %305 = vst [vmem:[%s279 + $0x30] sm:$0xf] %v304
                %v306 = vld [vmem:[%s278 + $0x68] sm:$0xf]
                %307 = vst [vmem:[%s279 + $0x34] sm:$0xf] %v306
                %v308 = vld [vmem:[%s278 + $0x70] sm:$0xf]
                %309 = vst [vmem:[%s279 + $0x38] sm:$0xf] %v308
                %v310 = vld [vmem:[%s278 + $0x78] sm:$0xf]
                %311 = vst [vmem:[%s279 + $0x3c] sm:$0xf] %v310
              $region53: #{apply.1} parent=47 // loop_footer
                %s277 = sadd.s32 1, %s273
              $region54: #{apply.1} parent=47 // loop_footer_branch
                %272 = sbr.rel target = $region50
              $region55: #{apply.1} parent=47 // loop_exit
                _
            $region48: #{apply.1} parent=39 // pred_fallthru
              _
          $region40: #{apply.1} parent=35 // pred_fallthru
            _
          %363 = vnop
        $region36: #{apply.1} parent=27 // pred_fallthru
          _
        // Predicated region
        $region74: #{apply.1} parent=27 // pred_check
          %p364 = pneg %p142
        $region75: #{apply.1} parent=27 // pred_check_branch
          %366 = sbr.rel (%p364) target = $region77
        $region76: #{apply.1} parent=27 // pred_region
          %p367 = scmp.lt.s32.totalorder %s24, 1
          %s368 = scalar_select %p367, %s24, 1
          %s369 = scalar_lea.vmem %s4, %s368
        $region77: #{apply.1} parent=27 // pred_fallthru
          _
        // Predicated region
        $region78: #{apply.1} parent=27 // pred_check
          %p370 = pneg %p168
        $region79: #{apply.1} parent=27 // pred_check_branch
          %372 = sbr.rel (%p370) target = $region81
        $region80: #{apply.1} parent=27 // pred_region
          %s373 = smul.u32 16, %s24
          %p374 = scmp.lt.s32.totalorder %s373, 31
          %s375 = scalar_select %p374, %s373, 31
          %s376 = smul.addr %s375, 4
          %s377 = scalar_lea.vmem %s5, %s376
          %s378 = smul.u32 16, %s24
        $region81: #{apply.1} parent=27 // pred_fallthru
          _
      $region28: #{apply.1} parent=5 // pred_fallthru
        _
      %p379 = scmp.le.s32.totalorder 1, %s16
      %p380 = scmp.lt.s32.totalorder %s16, 5
      %p381 = pnand %p379, %p380
      %p382 = pneg %p381
      // Predicated region
      $region82: #{apply.1} parent=5 // pred_check
        _
      $region83: #{apply.1} parent=5 // pred_check_branch
        %384 = sbr.rel (%p381) target = $region85
      $region84: #{apply.1} parent=5 // pred_region
        %s385 = ssub.s32 %s16, 1
        %s386 = sand.u32 %s109, 1
        %s387 = sand.u32 %s109, 1
        %s388 = smul.addr %s387, 64
        %s389 = scalar_lea.vmem [#allocation3], %s388
        // Predicated region
        $region86: #{apply.1} parent=84 // pred_check
          %p390 = pneg %p122
        $region87: #{apply.1} parent=84 // pred_check_branch
          %392 = sbr.rel (%p390) target = $region89
        $region88: #{apply.1} parent=84 // pred_region
          _
        $region89: #{apply.1} parent=84 // pred_fallthru
          _
        %p393 = scmp.lt.s32.totalorder %s25, 1
        %s394 = scalar_select %p393, %s25, 1
        %s395 = smul.addr %s394, 4
        %s396 = scalar_lea.vmem %s0, %s395
        %p397 = pneg %p54
        %p398 = pneg %p51
        %p399 = pneg %p75
        %p400 = pneg %p72
        %p401 = pneg %p96
        %p402 = pneg %p93
        %s403 = sand.u32 %s109, 1
        %s404 = sand.u32 %s109, 1
        %s405 = smul.addr %s404, 64
        %s406 = scalar_lea.vmem [#allocation3], %s405
        %p407 = pneg %p122
        %p408 = pneg %p119
        %p409 = scmp.lt.s32.totalorder %s26, 1
        %s410 = scalar_select %p409, %s26, 1
        %s411 = scalar_lea.vmem %s4, %s410
        %p412 = pneg %p148
        %p413 = pneg %p145
        %s414 = smul.u32 16, %s26
        %p415 = scmp.lt.s32.totalorder %s414, 31
        %s416 = scalar_select %p415, %s414, 31
        %s417 = smul.addr %s416, 4
        %s418 = scalar_lea.vmem %s5, %s417
        %p419 = pneg %p174
        %p420 = pneg %p171
        %p421 = pneg %p195
        %p422 = pneg %p192
        %p423 = pneg %p221
        %p424 = pneg %p218
        %s425 = sand.u32 %s208, 1
        %s426 = scalar_lea.sflag [#allocation5], %s425
        %s427 = sand.u32 %s208, 1
        %s428 = smul.addr %s427, 8
        %s429 = scalar_lea.vmem [#allocation4], %s428
        %p430 = scmp.lt.s32.totalorder %s25, 1
        %s431 = scalar_select %p430, %s25, 1
        %s432 = smul.addr %s431, 4
        %s433 = scalar_lea.vmem %s0, %s432
        %p434 = scmp.lt.s32.totalorder %s26, 1
        %s435 = scalar_select %p434, %s26, 1
        %s436 = scalar_lea.vmem %s4, %s435
        %s437 = smul.u32 16, %s26
        %p438 = scmp.lt.s32.totalorder %s437, 31
        %s439 = scalar_select %p438, %s437, 31
        %s440 = smul.addr %s439, 4
        %s441 = scalar_lea.vmem %s5, %s440
        %s442 = smul.u32 16, %s26
        %p444 = scmp.eq.s32.totalorder %s26, 0
        // Predicated region
        $region90: #{apply.1} parent=84 // pred_check
          %p445 = pneg %p444
        $region91: #{apply.1} parent=84 // pred_check_branch
          %447 = sbr.rel (%p445) target = $region93
        $region92: #{apply.1} parent=84 // pred_region
          %v448 = vld [vmem:[%s433] sm:$0xf]
          %v449 = vunpack.c.l.bf16 %v448
          %450 = vadd.xlane.f32.xlu0 %v449
          %v451 = vpop.xlane.xlu0 %450
          %v452 = vmul.f32 %v451, 0.0078125
          %v453 = vsub.f32 %v449, %v452
          %v454 = vmul.f32 %v453, %v453
          %455 = vadd.xlane.f32.xlu0 %v454
          %v456 = vpop.xlane.xlu0 %455
          %v457 = vmul.f32 %v456, 0.0078125
          %v458 = vadd.f32 %v457, 1e-05
          %v459 = vrsqrt.pop %v458
          %v460 = vmul.f32 %v453, %v459
          %v461 = vld [vmem:[%s1] sm:$0x1]
          %v463 = vlaneseq
          %v464 = vshrl.u32 %v463, 7
          %v465 = vsub.s32 0, %v464
          %v466 = vrot.slane %v461, %v465
          %v468 = vmul.f32 %v460, %v466
          %v469 = vld [vmem:[%s2] sm:$0x1]
          %v471 = vlaneseq
          %v472 = vshrl.u32 %v471, 7
          %v473 = vsub.s32 0, %v472
          %v474 = vrot.slane %v469, %v473
          %v476 = vadd.f32 %v468, %v474
          %v477 = vpack.c.bf16 %v476, %v476
          %478 = vst [vmem:[#allocation2] sm:$0xf] %v477
          %v479 = vld [vmem:[%s6] sm:$0x1]
          %v481 = vlaneseq
          %v482 = vshrl.u32 %v481, 7
          %v483 = vsub.s32 0, %v482
          %v484 = vrot.slane %v479, %v483
          %486 = vst [vmem:[%s429] sm:$0xff] %v484
        $region93: #{apply.1} parent=84 // pred_fallthru
          _
        %v487 = vld [vmem:[#allocation2] sm:$0xf]
        %v488 = vld [vmem:[%s389] sm:$0xf]
        %v489 = vld [vmem:[%s389 + $0x4] sm:$0xf]
        %v490 = vld [vmem:[%s389 + $0x8] sm:$0xf]
        %v491 = vld [vmem:[%s389 + $0xc] sm:$0xf]
        %v492 = vld [vmem:[%s389 + $0x10] sm:$0xf]
        %v493 = vld [vmem:[%s389 + $0x14] sm:$0xf]
        %v494 = vld [vmem:[%s389 + $0x18] sm:$0xf]
        %v495 = vld [vmem:[%s389 + $0x1c] sm:$0xf]
        %v496 = vld [vmem:[%s389 + $0x20] sm:$0xf]
        %v497 = vld [vmem:[%s389 + $0x24] sm:$0xf]
        %v498 = vld [vmem:[%s389 + $0x28] sm:$0xf]
        %v499 = vld [vmem:[%s389 + $0x2c] sm:$0xf]
        %v500 = vld [vmem:[%s389 + $0x30] sm:$0xf]
        %v501 = vld [vmem:[%s389 + $0x34] sm:$0xf]
        %v502 = vld [vmem:[%s389 + $0x38] sm:$0xf]
        %v503 = vld [vmem:[%s389 + $0x3c] sm:$0xf]
        %v504 = vld [vmem:[%s436] sm:$0x1]
        %v506 = vlaneseq
        %v507 = vshrl.u32 %v506, 7
        %v508 = vsub.s32 0, %v507
        %v509 = vrot.slane %v504, %v508
        %v527 = vunpack.c.l.b16 %v488
        %v528 = vunpack.c.l.b16 %v489
        %v529 = vunpack.c.l.b16 %v490
        %v530 = vunpack.c.l.b16 %v491
        %v531 = vunpack.c.l.b16 %v492
        %v532 = vunpack.c.l.b16 %v493
        %v533 = vunpack.c.l.b16 %v494
        %v534 = vunpack.c.l.b16 %v495
        %v535 = vunpack.c.l.b16 %v496
        %v536 = vunpack.c.l.b16 %v497
        %v537 = vunpack.c.l.b16 %v498
        %v538 = vunpack.c.l.b16 %v499
        %v539 = vunpack.c.l.b16 %v500
        %v540 = vunpack.c.l.b16 %v501
        %v541 = vunpack.c.l.b16 %v502
        %v542 = vunpack.c.l.b16 %v503
        %v543 = vpack.c.b16 %v528, %v527
        %v544 = vpack.c.b16 %v530, %v529
        %v545 = vpack.c.b16 %v532, %v531
        %v546 = vpack.c.b16 %v534, %v533
        %v547 = vpack.c.b16 %v536, %v535
        %v548 = vpack.c.b16 %v538, %v537
        %v549 = vpack.c.b16 %v540, %v539
        %v550 = vpack.c.b16 %v542, %v541
        %559 = vmatprep.subr.bf16.mxu0 0
        %560 = vmatpush1.bf16.msra.mxu0 %v543
        %561 = vmatprep.subr.bf16.mxu0 0
        %562 = vmatpush1.bf16.msra.mxu0 %v544
        %563 = vmatprep.subr.bf16.mxu0 0
        %564 = vmatpush1.bf16.msra.mxu0 %v545
        %565 = vmatprep.subr.bf16.mxu0 0
        %566 = vmatpush1.bf16.msra.mxu0 %v546
        %567 = vmatprep.subr.bf16.mxu0 0
        %568 = vmatpush1.bf16.msra.mxu0 %v547
        %569 = vmatprep.subr.bf16.mxu0 0
        %570 = vmatpush1.bf16.msra.mxu0 %v548
        %571 = vmatprep.subr.bf16.mxu0 0
        %572 = vmatpush1.bf16.msra.mxu0 %v549
        %573 = vmatprep.subr.bf16.mxu0 0
        %574 = vmatpush1.bf16.msra.mxu0 %v550
        %575 = vmatprep.subr.bf16.mxu0 0
        %576 = vmatpush1.bf16.msra.mxu0 0
        %577 = vmatprep.subr.bf16.mxu0 0
        %578 = vmatpush1.bf16.msra.mxu0 0
        %579 = vmatprep.subr.bf16.mxu0 0
        %580 = vmatpush1.bf16.msra.mxu0 0
        %581 = vmatprep.subr.bf16.mxu0 0
        %582 = vmatpush1.bf16.msra.mxu0 0
        %583 = vmatprep.subr.bf16.mxu0 0
        %584 = vmatpush1.bf16.msra.mxu0 0
        %585 = vmatprep.subr.bf16.mxu0 0
        %586 = vmatpush1.bf16.msra.mxu0 0
        %587 = vmatprep.subr.bf16.mxu0 0
        %588 = vmatpush1.bf16.msra.mxu0 0
        %589 = vmatprep.subr.bf16.mxu0 0
        %590 = vmatpush1.bf16.msra.mxu0 0
        %591 = vmatprep.mubr.bf16.mxu0 0
        %592 = vmatmul.mubr.bf16.gmra.mrb[0].mxu0 %v487
        %v593 = vpop.f32.mrb[0].mxu0
        %v594 = vadd.f32 %v509, %v593
        %v595 = vpop.f32.mrb[0].mxu0
        %v596 = vpop.f32.mrb[0].mxu0
        %v597 = vpop.f32.mrb[0].mxu0
        %598 = vdwg.mxu0
        %v599 = vmul.f32 %v594, 0.5
        %v600 = vmul.f32 %v594, 0.70710677
        %v601 = verf.f32.pop %v600
        %v602 = vadd.f32 %v601, 1.0
        %v603 = vmul.f32 %v599, %v602
        %v604 = vld [vmem:[%s429] sm:$0xff]
        %v605 = vpack.c.bf16 %v603, %v603
        %v606 = vld [vmem:[%s441] sm:$0xf]
        %v607 = vld [vmem:[%s441 + $0x4] sm:$0xf]
        %v608 = vld [vmem:[%s441 + $0x8] sm:$0xf]
        %v609 = vld [vmem:[%s441 + $0xc] sm:$0xf]
        %v610 = vld [vmem:[%s441 + $0x10] sm:$0xf]
        %v611 = vld [vmem:[%s441 + $0x14] sm:$0xf]
        %v612 = vld [vmem:[%s441 + $0x18] sm:$0xf]
        %v613 = vld [vmem:[%s441 + $0x1c] sm:$0xf]
        %v614 = vld [vmem:[%s441 + $0x20] sm:$0xf]
        %v615 = vld [vmem:[%s441 + $0x24] sm:$0xf]
        %v616 = vld [vmem:[%s441 + $0x28] sm:$0xf]
        %v617 = vld [vmem:[%s441 + $0x2c] sm:$0xf]
        %v618 = vld [vmem:[%s441 + $0x30] sm:$0xf]
        %v619 = vld [vmem:[%s441 + $0x34] sm:$0xf]
        %v620 = vld [vmem:[%s441 + $0x38] sm:$0xf]
        %v621 = vld [vmem:[%s441 + $0x3c] sm:$0xf]
        %v638 = vunpack.c.l.b16 %v606
        %v639 = vunpack.c.l.b16 %v607
        %v640 = vunpack.c.l.b16 %v608
        %v641 = vunpack.c.l.b16 %v609
        %v642 = vunpack.c.l.b16 %v610
        %v643 = vunpack.c.l.b16 %v611
        %v644 = vunpack.c.l.b16 %v612
        %v645 = vunpack.c.l.b16 %v613
        %v646 = vunpack.c.l.b16 %v614
        %v647 = vunpack.c.l.b16 %v615
        %v648 = vunpack.c.l.b16 %v616
        %v649 = vunpack.c.l.b16 %v617
        %v650 = vunpack.c.l.b16 %v618
        %v651 = vunpack.c.l.b16 %v619
        %v652 = vunpack.c.l.b16 %v620
        %v653 = vunpack.c.l.b16 %v621
        %v654 = vpack.c.b16 %v639, %v638
        %v655 = vpack.c.b16 %v641, %v640
        %v656 = vpack.c.b16 %v643, %v642
        %v657 = vpack.c.b16 %v645, %v644
        %v658 = vpack.c.b16 %v647, %v646
        %v659 = vpack.c.b16 %v649, %v648
        %v660 = vpack.c.b16 %v651, %v650
        %v661 = vpack.c.b16 %v653, %v652
        %670 = vmatprep.subr.bf16.mxu0 0
        %671 = vmatpush1.bf16.msra.mxu0 %v654
        %672 = vmatprep.subr.bf16.mxu0 0
        %673 = vmatpush1.bf16.msra.mxu0 %v655
        %674 = vmatprep.subr.bf16.mxu0 0
        %675 = vmatpush1.bf16.msra.mxu0 %v656
        %676 = vmatprep.subr.bf16.mxu0 0
        %677 = vmatpush1.bf16.msra.mxu0 %v657
        %678 = vmatprep.subr.bf16.mxu0 0
        %679 = vmatpush1.bf16.msra.mxu0 %v658
        %680 = vmatprep.subr.bf16.mxu0 0
        %681 = vmatpush1.bf16.msra.mxu0 %v659
        %682 = vmatprep.subr.bf16.mxu0 0
        %683 = vmatpush1.bf16.msra.mxu0 %v660
        %684 = vmatprep.subr.bf16.mxu0 0
        %685 = vmatpush1.bf16.msra.mxu0 %v661
        %686 = vmatprep.subr.bf16.mxu0 0
        %687 = vmatpush1.bf16.msra.mxu0 0
        %688 = vmatprep.subr.bf16.mxu0 0
        %689 = vmatpush1.bf16.msra.mxu0 0
        %690 = vmatprep.subr.bf16.mxu0 0
        %691 = vmatpush1.bf16.msra.mxu0 0
        %692 = vmatprep.subr.bf16.mxu0 0
        %693 = vmatpush1.bf16.msra.mxu0 0
        %694 = vmatprep.subr.bf16.mxu0 0
        %695 = vmatpush1.bf16.msra.mxu0 0
        %696 = vmatprep.subr.bf16.mxu0 0
        %697 = vmatpush1.bf16.msra.mxu0 0
        %698 = vmatprep.subr.bf16.mxu0 0
        %699 = vmatpush1.bf16.msra.mxu0 0
        %700 = vmatprep.subr.bf16.mxu0 0
        %701 = vmatpush1.bf16.msra.mxu0 0
        %702 = vmatprep.mubr.bf16.mxu0 0
        %703 = vmatmul.mubr.bf16.gmra.mrb[0].mxu0 %v605
        %v704 = vpop.f32.mrb[0].mxu0
        %v705 = vadd.f32 0.0, %v704
        %v706 = vpop.f32.mrb[0].mxu0
        %v707 = vpop.f32.mrb[0].mxu0
        %v708 = vpop.f32.mrb[0].mxu0
        %709 = vdwg.mxu0
        %v710 = vadd.f32 %v604, %v705
        %711 = vst [vmem:[%s429] sm:$0xff] %v710
        %s712 = sand.u32 %s208, 1
        %s713 = scalar_lea.sflag [#allocation5], %s712
        %s714 = sand.u32 %s208, 1
        %s715 = smul.addr %s714, 8
        %s716 = scalar_lea.vmem [#allocation4], %s715
        // Predicated region
        $region94: #{apply.1} parent=84 // pred_check
          %p717 = pneg %p218
        $region95: #{apply.1} parent=84 // pred_check_branch
          %719 = sbr.rel (%p717) target = $region97
        $region96: #{apply.1} parent=84 // pred_region
          %s721 = ssub.s32 128, 128
          %722 = vsyncadd %s713, %s721
          %s723 = smul.addr %s25, 128
          %s724 = scalar_lea.hbm %s7, %s723
          %s726 = sshll.u32 %s716, 4
          %s727 = int_to_ptr.vmem [resolvable:$true] %s726
          %729 = dma.vmem_to_hbm [thread:$0]  %s727, 128, %s724, %s713
        $region97: #{apply.1} parent=84 // pred_fallthru
          _
      $region85: #{apply.1} parent=5 // pred_fallthru
        _
      %p730 = scmp.le.s32.totalorder 2, %s16
      // Predicated region
      $region98: #{apply.1} parent=5 // pred_check
        %p731 = pneg %p730
      $region99: #{apply.1} parent=5 // pred_check_branch
        %733 = sbr.rel (%p731) target = $region101
      $region100: #{apply.1} parent=5 // pred_region
        %s734 = ssub.s32 %s16, 2
        // Predicated region
        $region102: #{apply.1} parent=100 // pred_check
          %p735 = pneg %p224
        $region103: #{apply.1} parent=100 // pred_check_branch
          %737 = sbr.rel (%p735) target = $region105
        $region104: #{apply.1} parent=100 // pred_region
          %s738 = sand.u32 %s209, 1
          %s739 = scalar_lea.sflag [#allocation5], %s738
          %s740 = sand.u32 %s209, 1
          %s741 = smul.addr %s740, 8
          %s742 = scalar_lea.vmem [#allocation4], %s741
          %743 = dma.done %s739, 128
        $region105: #{apply.1} parent=100 // pred_fallthru
          _
      $region101: #{apply.1} parent=5 // pred_fallthru
        _
    $region6: #{apply.1} parent=1 // loop_footer
      %s20 = sadd.s32 1, %s16
    $region7: #{apply.1} parent=1 // loop_footer_branch
      %15 = sbr.rel target = $region3
    $region8: #{apply.1} parent=1 // loop_exit
      _
    %744 = vsyncpa [#allocation5], 1
    %s745 = scalar_lea.sflag [#allocation5], 1
    %746 = vsyncpa %s745, 1

</llo_original>
